<compile_context>
chip_gen: v6e
topology: v6e:2x2x1
jax: 0.10.0
libtpu: 0.0.40
codegen_flags: <defaults>
</compile_context>

<pallas_src>
import jax
import jax.numpy as jnp
from jax.experimental import pallas as pl
from jax.experimental.pallas import tpu as pltpu


def _conv2d_same_matmul_kernel(x_ref, wt_ref, b_ref, o_ref):
    """Reflect-pad 'same' conv as ONE matmul per grid block.

    x_ref : (TM, kh*W*Cin)       bf16  im2row-over-height LHS (H reflection and
                                       kh vertical taps pre-folded in the wrapper)
    wt_ref: (kh*W*Cin, W*Cout)   bf16  block-Toeplitz weights (kw horizontal taps
                                       and W-direction reflection folded in,
                                       stacked over kh along K)
    b_ref : (1, W*Cout)          f32   bias tiled per output column
    o_ref : (TM, W*Cout)         f32   output rows (exactly 128 lanes -> unmasked vst)
    """
    p = jnp.dot(x_ref[...], wt_ref[...], preferred_element_type=jnp.float32)
    o_ref[...] = (p + b_ref[...]).astype(o_ref.dtype)


def _row_toeplitz_weights(w_hwio, width):
    """Fold horizontal taps + W-direction reflection into (kh, W*Cin, W*Cout).

    wt[dy][j*Cin + ci, x*Cout + co] = sum over dx with reflect(x + dx - pa) == j
                                      of w[dy, dx, ci, co]
    """
    kh, kw, cin, cout = w_hwio.shape
    pa = kw // 2                                   # left padding of ReflectionPad2d
    x_idx = jnp.arange(width)[:, None]             # output column
    dx_idx = jnp.arange(kw)[None, :]               # horizontal tap
    j = x_idx + dx_idx - pa                        # source column (pre-reflection)
    j = jnp.where(j < 0, -j, j)                    # reflect left edge
    j = jnp.where(j >= width, 2 * (width - 1) - j, j)   # reflect right edge
    onehot = jax.nn.one_hot(j, width, dtype=w_hwio.dtype)       # (x, dx, j)
    wt = jnp.einsum("xdj,adco->ajcxo", onehot, w_hwio)          # (kh, j, ci, x, co)
    return wt.reshape(kh, width * cin, width * cout)


def _pick_num_m_blocks(m_rows):
    """Split M across TensorCores on v7x; keep a single step on 1-TC chips."""
    n_tc = 1
    try:
        if "v7" in jax.devices()[0].device_kind.lower():
            n_tc = 2
    except Exception:                              # pragma: no cover
        pass
    blocks = n_tc
    # Each block's sublane extent must stay a multiple of 8 (or be the full M).
    while blocks > 1 and (m_rows % blocks != 0 or (m_rows // blocks) % 8 != 0):
        blocks -= 1
    return max(blocks, 1)


def conv2d_same_forward(x_nchw, w_oihw, b):
    """Pallas forward of Conv2dSame: reflect pad (ka, kb) + Conv2d(k) + bias.

    x_nchw: (N, Cin, H, W) f32 (PyTorch layout)
    w_oihw: (Cout, Cin, kh, kw) f32, b: (Cout,) f32
    returns (N, Cout, H, W) f32
    """
    n, cin, height, width = x_nchw.shape
    cout, _, kh, kw = w_oihw.shape
    # Single-reflection assumption of ReflectionPad2d (kernel smaller than image).
    assert kh // 2 < height and kw // 2 < width, "kernel too large for reflect pad"

    pa_h = kh // 2                                 # top padding of ReflectionPad2d

    # Layout glue (index shuffling only, fused by XLA with the bf16 cast):
    # NCHW -> channels-last rows.
    x_rows = (jnp.transpose(x_nchw, (0, 2, 3, 1))
              .reshape(n, height, width * cin)
              .astype(jnp.bfloat16))

    # Fold H-direction reflection + kh vertical taps into the LHS (bf16, ~12 KiB):
    # x_lhs[n*H + y, dy*(W*Cin) + :] = x_rows[n, reflect_h(y + dy - pa_h), :]
    y_idx = jnp.arange(height)[:, None]
    dy_idx = jnp.arange(kh)[None, :]
    src = y_idx + dy_idx - pa_h
    src = jnp.where(src < 0, -src, src)                            # reflect top
    src = jnp.where(src >= height, 2 * (height - 1) - src, src)    # reflect bottom
    x_lhs = x_rows[:, src, :].reshape(n * height, kh * width * cin)

    # Block-Toeplitz weights (kw taps + W reflection folded), stacked over kh
    # along K so the whole conv is a single K = kh*W*Cin matmul.
    w_hwio = jnp.transpose(w_oihw, (2, 3, 1, 0)).astype(jnp.float32)
    wt = (_row_toeplitz_weights(w_hwio, width)
          .reshape(kh * width * cin, width * cout)
          .astype(jnp.bfloat16))
    b_row = jnp.tile(b.astype(jnp.float32), width).reshape(1, width * cout)

    m_rows = n * height
    num_blocks = _pick_num_m_blocks(m_rows)
    tm = m_rows // num_blocks

    out_rows = pl.pallas_call(
        _conv2d_same_matmul_kernel,
        out_shape=jax.ShapeDtypeStruct((m_rows, width * cout), jnp.float32),
        grid_spec=pltpu.PrefetchScalarGridSpec(
            num_scalar_prefetch=0,
            grid=(num_blocks,),
            in_specs=[
                pl.BlockSpec((tm, kh * width * cin), lambda i: (i, 0)),
                pl.BlockSpec((kh * width * cin, width * cout), lambda i: (0, 0)),
                pl.BlockSpec((1, width * cout), lambda i: (0, 0)),
            ],
            out_specs=pl.BlockSpec((tm, width * cout), lambda i: (i, 0)),
        ),
        compiler_params=pltpu.CompilerParams(
            dimension_semantics=("parallel",),     # v7x: M blocks shard across TCs
        ),
    )(x_lhs, wt, b_row)

    # (N*H, W*Cout) -> (N, H, W, Cout) is a free minor-dim split; then NHWC -> NCHW.
    return jnp.transpose(out_rows.reshape(n, height, width, cout), (0, 3, 1, 2))


def _reference_forward(x_nchw, w_oihw, b):
    """lax.conv reference using the same bf16-rounded activations/weights."""
    x = jnp.transpose(x_nchw, (0, 2, 3, 1)).astype(jnp.bfloat16).astype(jnp.float32)
    w = jnp.transpose(w_oihw, (2, 3, 1, 0)).astype(jnp.bfloat16).astype(jnp.float32)
    kh, kw = w.shape[0], w.shape[1]
    ka_h = kh // 2
    kb_h = ka_h - 1 if kh % 2 == 0 else ka_h
    ka_w = kw // 2
    kb_w = ka_w - 1 if kw % 2 == 0 else ka_w
    xp = jnp.pad(x, ((0, 0), (ka_h, kb_h), (ka_w, kb_w), (0, 0)), mode="reflect")
    y = jax.lax.conv_general_dilated(
        xp, w, window_strides=(1, 1), padding="VALID",
        dimension_numbers=("NHWC", "HWIO", "NHWC"))
    y = y + b.astype(jnp.float32)
    return jnp.transpose(y, (0, 3, 1, 2))


def _init_conv_params(key, c_in, c_out, k):
    # Mimic PyTorch Conv2d default init: U(-1/sqrt(fan_in), +1/sqrt(fan_in)).
    kw_key, kb_key = jax.random.split(key)
    bound = 1.0 / (c_in * k * k) ** 0.5
    w = jax.random.uniform(kw_key, (c_out, c_in, k, k), jnp.float32, -bound, bound)
    b = jax.random.uniform(kb_key, (c_out,), jnp.float32, -bound, bound)
    return w, b


if __name__ == "__main__":
    key = jax.random.PRNGKey(0)
    k_x, k_p = jax.random.split(key)

    N, C_IN, C_OUT, H, W, K = 2, 4, 8, 16, 16, 3
    x = jax.random.normal(k_x, (N, C_IN, H, W), jnp.float32)   # NCHW, like PyTorch
    w, b = _init_conv_params(k_p, C_IN, C_OUT, K)

    out = jax.block_until_ready(conv2d_same_forward(x, w, b))
    ref = _reference_forward(x, w, b)

    assert out.shape == (N, C_OUT, H, W)
    # bf16 MXU operands (f32 accumulation) -> compare against a bf16-rounded
    # reference; remaining differences are accumulation order + border-weight
    # rounding, well inside 2e-2.
    assert jnp.allclose(out, ref, atol=2e-2, rtol=2e-2), float(
        jnp.max(jnp.abs(out - ref)))

    print("KERNEL_OK")
</pallas_src>

<mosaic_0001>
module attributes {stable_mosaic.version = 11 : i64} {
  func.func @_conv2d_same_matmul_kernel(%arg0: i32, %arg1: memref<32x192xbf16, #tpu.memory_space<vmem>>, %arg2: memref<192x128xbf16, #tpu.memory_space<vmem>>, %arg3: memref<1x128xf32, #tpu.memory_space<vmem>>, %arg4: memref<32x128xf32, #tpu.memory_space<vmem>>) attributes {dimension_semantics = [#tpu.dimension_semantics<parallel>], iteration_bounds = array<i64: 1>, scalar_prefetch = 0 : i64, scratch_operands = 0 : i64, tpu.core_type = #tpu.core_type<tc>, window_params = [{transform_indices = @transform_0, window_bounds = array<i64: 32, 192>}, {pipeline_mode = #tpu.pipeline_mode<synchronous>, transform_indices = @transform_1, window_bounds = array<i64: 192, 128>}, {pipeline_mode = #tpu.pipeline_mode<synchronous>, transform_indices = @transform_2, window_bounds = array<i64: 1, 128>}, {transform_indices = @transform_3, window_bounds = array<i64: 32, 128>}]} {
    %c0 = arith.constant 0 : index
    %c0_0 = arith.constant 0 : index
    %0 = vector.load %arg1[%c0, %c0_0] : memref<32x192xbf16, #tpu.memory_space<vmem>>, vector<32x192xbf16>
    %c0_1 = arith.constant 0 : index
    %c0_2 = arith.constant 0 : index
    %1 = vector.load %arg2[%c0_1, %c0_2] : memref<192x128xbf16, #tpu.memory_space<vmem>>, vector<192x128xbf16>
    %cst = arith.constant dense<0.000000e+00> : vector<32x128xf32>
    %2 = tpu.matmul %0, %1, %cst {dimension_numbers = #tpu.dot_dimension_numbers<[1], [0], [0], [1], [0, 0, 1, 1], [], []>} : vector<32x192xbf16>, vector<192x128xbf16>, vector<32x128xf32> -> vector<32x128xf32>
    %c0_3 = arith.constant 0 : index
    %c0_4 = arith.constant 0 : index
    %3 = vector.load %arg3[%c0_3, %c0_4] : memref<1x128xf32, #tpu.memory_space<vmem>>, vector<1x128xf32>
    %4 = vector.broadcast %3 : vector<1x128xf32> to vector<32x128xf32>
    %5 = arith.addf %2, %4 : vector<32x128xf32>
    %c0_5 = arith.constant 0 : index
    %c0_6 = arith.constant 0 : index
    %6 = vector.load %arg4[%c0_5, %c0_6] : memref<32x128xf32, #tpu.memory_space<vmem>>, vector<32x128xf32>
    tpu.vector_store %arg4[%c0_5, %c0_6], %5 {strides = array<i32>} : memref<32x128xf32, #tpu.memory_space<vmem>>, vector<32x128xf32>,
    return
  }
  func.func @transform_0(%arg0: i32) -> (i32, i32) {
    %c0_i32 = arith.constant 0 : i32
    %c0_i32_0 = arith.constant 0 : i32
    return %arg0, %c0_i32 : i32, i32
  }
  func.func @transform_1(%arg0: i32) -> (i32, i32) {
    %c0_i32 = arith.constant 0 : i32
    %c0_i32_0 = arith.constant 0 : i32
    %c0_i32_1 = arith.constant 0 : i32
    return %c0_i32, %c0_i32_0 : i32, i32
  }
  func.func @transform_2(%arg0: i32) -> (i32, i32) {
    %c0_i32 = arith.constant 0 : i32
    %c0_i32_0 = arith.constant 0 : i32
    %c0_i32_1 = arith.constant 0 : i32
    return %c0_i32, %c0_i32_0 : i32, i32
  }
  func.func @transform_3(%arg0: i32) -> (i32, i32) {
    %c0_i32 = arith.constant 0 : i32
    %c0_i32_0 = arith.constant 0 : i32
    return %arg0, %c0_i32 : i32, i32
  }
}

</mosaic_0001>

<llo_original>
// kernel: tpu_custom_call.1
$region0: #{tpu_custom_call.1}
  #allocation0 [shape = 'u32[]', space=smem, size = 0x4, offset = 0x4, fixed_abs, tag = 'smem constant byte address 0x4 - core index']
  #allocation1 [shape = 'u32[144,128]{1,0:T(1,128)}', space=vmem, size = 0x12000, scoped, tag = 'internal scratch']
  %s0 = inlined_call_operand.hbm [shape: bf16[32,192], index: 0, kind: input, shape index: {}]
  %s1 = inlined_call_operand.hbm [shape: bf16[192,128], index: 1, kind: input, shape index: {}]
  %s2 = inlined_call_operand.vmem [shape: f32[1,128], index: 2, kind: input, shape index: {}]
  %s3 = inlined_call_operand.hbm [shape: f32[32,128], index: 3, kind: output, shape index: {}]
  %s4 = sld [smem:[#allocation0]]
  $region30: #{tpu_custom_call.1} parent=0
    _
  %s6 = ssub.s32 1, %s4
  %s7 = scalar_select 0, %s6, %s4
  $region1: #{tpu_custom_call.1} parent=0
    #allocation2 [shape = 'u8[16384]{0}', space=vmem, size = 0x4000, scoped, tag = 'input window, operand 0, single buffered']
    #allocation3 [shape = 's32[1]{0}', space=sflag, size = 0x4, scoped, tag = 'scoped memory for tpu_custom_call.1']
    #allocation4 [shape = 's32[1]{0}', space=sflag, size = 0x4, scoped, tag = 'scoped memory for tpu_custom_call.1']
    #allocation5 [shape = 'u8[49152]{0}', space=vmem, size = 0xc000, scoped, tag = 'input window, operand 1, single buffered']
    #allocation6 [shape = 's32[1]{0}', space=sflag, size = 0x4, scoped, tag = 'scoped memory for tpu_custom_call.1']
    #allocation7 [shape = 'u8[16384]{0}', space=vmem, size = 0x4000, scoped, tag = 'output window, operand 0, single buffered']
    %8 = vsyncpa [#allocation3], 0
    %9 = vsyncpa [#allocation6], 0
    %10 = vsyncpa [#allocation4], 0
    // Predicated region
    $region2: #{tpu_custom_call.1} parent=1 // pred_check
      _
    $region3: #{tpu_custom_call.1} parent=1 // pred_check_branch
      %12 = sbr.rel (0) target = $region5
    $region4: #{tpu_custom_call.1} parent=1 // pred_region
      %s14 = ssub.s32 512, 512
      %15 = vsyncadd [#allocation3], %s14
      %s16 = sshll.u32 [#allocation2], 4
      %s17 = int_to_ptr.vmem [resolvable:$true] %s16
      %22 = dma.hbm_to_vmem [thread:$0]  %s0, 512, %s17, [#allocation3], 128, 128, 8
    $region5: #{tpu_custom_call.1} parent=1 // pred_fallthru
      _
    // Predicated region
    $region6: #{tpu_custom_call.1} parent=1 // pred_check
      _
    $region7: #{tpu_custom_call.1} parent=1 // pred_check_branch
      %24 = sbr.rel (0) target = $region9
    $region8: #{tpu_custom_call.1} parent=1 // pred_region
      %s26 = ssub.s32 1536, 1536
      %27 = vsyncadd [#allocation6], %s26
      %s28 = sshll.u32 [#allocation5], 4
      %s29 = int_to_ptr.vmem [resolvable:$true] %s28
      %34 = dma.hbm_to_vmem [thread:$0]  %s1, 1536, %s29, [#allocation6], 64, 64, 4
    $region9: #{tpu_custom_call.1} parent=1 // pred_fallthru
      _
    // Predicated region
    $region10: #{tpu_custom_call.1} parent=1 // pred_check
      _
    $region11: #{tpu_custom_call.1} parent=1 // pred_check_branch
      %36 = sbr.rel (0) target = $region13
    $region12: #{tpu_custom_call.1} parent=1 // pred_region
      _
    $region13: #{tpu_custom_call.1} parent=1 // pred_fallthru
      _
    // Predicated region
    $region14: #{tpu_custom_call.1} parent=1 // pred_check
      _
    $region15: #{tpu_custom_call.1} parent=1 // pred_check_branch
      %38 = sbr.rel (0) target = $region17
    $region16: #{tpu_custom_call.1} parent=1 // pred_region
      %39 = dma.done [#allocation3], 512
    $region17: #{tpu_custom_call.1} parent=1 // pred_fallthru
      _
    // Predicated region
    $region18: #{tpu_custom_call.1} parent=1 // pred_check
      _
    $region19: #{tpu_custom_call.1} parent=1 // pred_check_branch
      %41 = sbr.rel (0) target = $region21
    $region20: #{tpu_custom_call.1} parent=1 // pred_region
      %42 = dma.done [#allocation6], 1536
    $region21: #{tpu_custom_call.1} parent=1 // pred_fallthru
      _
    %v44 = vld [vmem:[#allocation2] sm:$0xff]
    %v45 = vld [vmem:[#allocation2 + $0x8] sm:$0xff]
    %v46 = vld [vmem:[#allocation2 + $0x10] sm:$0xff]
    %v47 = vld [vmem:[#allocation2 + $0x18] sm:$0xff]
    %v48 = vld [vmem:[#allocation5] sm:$0xf]
    %v49 = vld [vmem:[#allocation5 + $0x4] sm:$0xf]
    %v50 = vld [vmem:[#allocation5 + $0x8] sm:$0xf]
    %v51 = vld [vmem:[#allocation5 + $0xc] sm:$0xf]
    %v52 = vld [vmem:[#allocation5 + $0x10] sm:$0xf]
    %v53 = vld [vmem:[#allocation5 + $0x14] sm:$0xf]
    %v54 = vld [vmem:[#allocation5 + $0x18] sm:$0xf]
    %v55 = vld [vmem:[#allocation5 + $0x1c] sm:$0xf]
    %v56 = vld [vmem:[#allocation5 + $0x20] sm:$0xf]
    %v57 = vld [vmem:[#allocation5 + $0x24] sm:$0xf]
    %v58 = vld [vmem:[#allocation5 + $0x28] sm:$0xf]
    %v59 = vld [vmem:[#allocation5 + $0x2c] sm:$0xf]
    %v60 = vld [vmem:[#allocation5 + $0x30] sm:$0xf]
    %v61 = vld [vmem:[#allocation5 + $0x34] sm:$0xf]
    %v62 = vld [vmem:[#allocation5 + $0x38] sm:$0xf]
    %v63 = vld [vmem:[#allocation5 + $0x3c] sm:$0xf]
    %v64 = vld [vmem:[#allocation5 + $0x40] sm:$0xf]
    %v65 = vld [vmem:[#allocation5 + $0x44] sm:$0xf]
    %v66 = vld [vmem:[#allocation5 + $0x48] sm:$0xf]
    %v67 = vld [vmem:[#allocation5 + $0x4c] sm:$0xf]
    %v68 = vld [vmem:[#allocation5 + $0x50] sm:$0xf]
    %v69 = vld [vmem:[#allocation5 + $0x54] sm:$0xf]
    %v70 = vld [vmem:[#allocation5 + $0x58] sm:$0xf]
    %v71 = vld [vmem:[#allocation5 + $0x5c] sm:$0xf]
    %v72 = vld [vmem:[%s2] sm:$0x1]
    %v74 = vlaneseq
    %v75 = vshrl.u32 %v74, 7
    %v76 = vsub.s32 0, %v75
    %v77 = vrot.slane %v72, %v76
    %v83 = vunpack.c.l.b16 %v44
    %v84 = vunpack.c.h.b16 %v44
    %v85 = vunpack.c.l.b16 %v45
    %v86 = vunpack.c.h.b16 %v45
    %v87 = vunpack.c.l.b16 %v46
    %v88 = vunpack.c.h.b16 %v46
    %v89 = vunpack.c.l.b16 %v47
    %v90 = vunpack.c.h.b16 %v47
    %v91 = vpack.c.b16 %v85, %v83
    %v92 = vpack.c.b16 %v86, %v84
    %v93 = vpack.c.b16 %v89, %v87
    %v94 = vpack.c.b16 %v90, %v88
    %v121 = vunpack.c.l.b16 %v48
    %v122 = vunpack.c.l.b16 %v49
    %v123 = vunpack.c.l.b16 %v50
    %v124 = vunpack.c.l.b16 %v51
    %v125 = vunpack.c.l.b16 %v52
    %v126 = vunpack.c.l.b16 %v53
    %v127 = vunpack.c.l.b16 %v54
    %v128 = vunpack.c.l.b16 %v55
    %v129 = vunpack.c.l.b16 %v56
    %v130 = vunpack.c.l.b16 %v57
    %v131 = vunpack.c.l.b16 %v58
    %v132 = vunpack.c.l.b16 %v59
    %v133 = vunpack.c.l.b16 %v60
    %v134 = vunpack.c.l.b16 %v61
    %v135 = vunpack.c.l.b16 %v62
    %v136 = vunpack.c.l.b16 %v63
    %v137 = vunpack.c.l.b16 %v64
    %v138 = vunpack.c.l.b16 %v65
    %v139 = vunpack.c.l.b16 %v66
    %v140 = vunpack.c.l.b16 %v67
    %v141 = vunpack.c.l.b16 %v68
    %v142 = vunpack.c.l.b16 %v69
    %v143 = vunpack.c.l.b16 %v70
    %v144 = vunpack.c.l.b16 %v71
    %v145 = vpack.c.b16 %v122, %v121
    %v146 = vpack.c.b16 %v124, %v123
    %v147 = vpack.c.b16 %v126, %v125
    %v148 = vpack.c.b16 %v128, %v127
    %v149 = vpack.c.b16 %v130, %v129
    %v150 = vpack.c.b16 %v132, %v131
    %v151 = vpack.c.b16 %v134, %v133
    %v152 = vpack.c.b16 %v136, %v135
    %v153 = vpack.c.b16 %v138, %v137
    %v154 = vpack.c.b16 %v140, %v139
    %v155 = vpack.c.b16 %v142, %v141
    %v156 = vpack.c.b16 %v144, %v143
    %vm169 = vcmask 523264
    %v171 = vsel %vm169, %v92, 0
    %v174 = vsel %vm169, %v94, 0
    %176 = vmatprep.subr.bf16.mxu0 0
    %177 = vmatpush1.bf16.msra.mxu0 %v152
    %178 = vmatprep.subr.bf16.mxu0 0
    %179 = vmatpush1.bf16.msra.mxu0 %v151
    %180 = vmatprep.subr.bf16.mxu0 0
    %181 = vmatpush1.bf16.msra.mxu0 %v150
    %182 = vmatprep.subr.bf16.mxu0 0
    %183 = vmatpush1.bf16.msra.mxu0 %v149
    %184 = vmatprep.subr.bf16.mxu0 0
    %185 = vmatpush1.bf16.msra.mxu0 %v148
    %186 = vmatprep.subr.bf16.mxu0 0
    %187 = vmatpush1.bf16.msra.mxu0 %v147
    %188 = vmatprep.subr.bf16.mxu0 0
    %189 = vmatpush1.bf16.msra.mxu0 %v146
    %190 = vmatprep.subr.bf16.mxu0 0
    %191 = vmatpush1.bf16.msra.mxu0 %v145
    %192 = vmatprep.subr.bf16.mxu0 0
    %193 = vmatpush2.bf16.msra.mxu0 0
    %194 = vmatprep.subr.bf16.mxu0 0
    %195 = vmatpush2.bf16.msra.mxu0 0
    %196 = vmatprep.subr.bf16.mxu0 0
    %197 = vmatpush2.bf16.msra.mxu0 0
    %198 = vmatprep.subr.bf16.mxu0 0
    %199 = vmatpush2.bf16.msra.mxu0 0
    %200 = vmatprep.subr.bf16.mxu0 0
    %201 = vmatpush2.bf16.msra.mxu0 %v156
    %202 = vmatprep.subr.bf16.mxu0 0
    %203 = vmatpush2.bf16.msra.mxu0 %v155
    %204 = vmatprep.subr.bf16.mxu0 0
    %205 = vmatpush2.bf16.msra.mxu0 %v154
    %206 = vmatprep.subr.bf16.mxu0 0
    %207 = vmatpush2.bf16.msra.mxu0 %v153
    %208 = vmatprep.mubr.bf16.mxu0 %v171
    %209 = vmatmul.mubr.bf16.gmra.mxu0 %v91
    %v210 = vpop.f32.mrf.mxu0
    %v211 = vadd.f32 %v77, %v210
    %v212 = vpop.f32.mrf.mxu0
    %v213 = vpop.f32.mrf.mxu0
    %v214 = vadd.f32 %v77, %v213
    %v215 = vpop.f32.mrf.mxu0
    %216 = vmatprep.mubr.bf16.mxu0 %v174
    %217 = vmatmul.mubr.bf16.gmra.mxu0 %v93
    %v218 = vpop.f32.mrf.mxu0
    %v219 = vadd.f32 %v77, %v218
    %v220 = vpop.f32.mrf.mxu0
    %v221 = vpop.f32.mrf.mxu0
    %v222 = vadd.f32 %v77, %v221
    %v223 = vpop.f32.mrf.mxu0
    %224 = vdwg.mxu0
    %225 = vst [vmem:[#allocation7] sm:$0xff] %v211
    %226 = vst [vmem:[#allocation7 + $0x8] sm:$0xff] %v214
    %227 = vst [vmem:[#allocation7 + $0x10] sm:$0xff] %v219
    %228 = vst [vmem:[#allocation7 + $0x18] sm:$0xff] %v222
    // Predicated region
    $region22: #{tpu_custom_call.1} parent=1 // pred_check
      _
    $region23: #{tpu_custom_call.1} parent=1 // pred_check_branch
      %230 = sbr.rel (0) target = $region25
    $region24: #{tpu_custom_call.1} parent=1 // pred_region
      %s232 = ssub.s32 512, 512
      %233 = vsyncadd [#allocation4], %s232
      %s234 = sshll.u32 [#allocation7], 4
      %s235 = int_to_ptr.vmem [resolvable:$true] %s234
      %240 = dma.vmem_to_hbm [thread:$0]  %s235, 512, %s3, [#allocation4], 128, 128, 8
    $region25: #{tpu_custom_call.1} parent=1 // pred_fallthru
      _
    // Predicated region
    $region26: #{tpu_custom_call.1} parent=1 // pred_check
      _
    $region27: #{tpu_custom_call.1} parent=1 // pred_check_branch
      %242 = sbr.rel (0) target = $region29
    $region28: #{tpu_custom_call.1} parent=1 // pred_region
      %243 = dma.done [#allocation4], 512
    $region29: #{tpu_custom_call.1} parent=1 // pred_fallthru
      _
    %244 = vsyncpa [#allocation3], 1
    %245 = vsyncpa [#allocation6], 1
    %246 = vsyncpa [#allocation4], 1

</llo_original>
